<compile_context>
chip_gen: v5e
topology: v5e:2x2
jax: 0.10.0
libtpu: 0.0.40
codegen_flags: <defaults>
</compile_context>

<pallas_src>
import jax
import jax.numpy as jnp
from jax.experimental import pallas as pl
from jax.experimental.pallas import tpu as pltpu


def _round_up(x, m):
    return (x + m - 1) // m * m


# --------------------------------------------------------------------------
# Kernels
# --------------------------------------------------------------------------

def _mlm_kernel_single_k(x_ref, w_ref, b_ref, o_ref):
    """Full contraction in one step (H fits in a single K block).

    x_ref: (tm, Hp)   w_ref: (Hp, tn)   b_ref: (1, tn)   o_ref: (tm, tn)
    """
    acc = jnp.dot(x_ref[...], w_ref[...], preferred_element_type=jnp.float32)
    o_ref[...] = (acc + b_ref[...].astype(jnp.float32)).astype(o_ref.dtype)


def _mlm_kernel_multi_k(x_ref, w_ref, b_ref, o_ref, acc_ref):
    """K-tiled path for very large hidden dims (H > tk_max).

    x_ref: (tm, tk)   w_ref: (tk, tn)   b_ref: (1, tn)
    o_ref: (tm, tn)   acc_ref: (tm, tn) f32 scratch, resident across K.
    """
    k = pl.program_id(2)

    @pl.when(k == 0)
    def _():
        acc_ref[...] = jnp.zeros_like(acc_ref)

    acc_ref[...] += jnp.dot(x_ref[...], w_ref[...],
                            preferred_element_type=jnp.float32)

    @pl.when(k == pl.num_programs(2) - 1)
    def _():
        o_ref[...] = (acc_ref[...] + b_ref[...].astype(jnp.float32)).astype(o_ref.dtype)


# --------------------------------------------------------------------------
# Tiling plan + one-time parameter preparation
# --------------------------------------------------------------------------

def _pick_tn(V, tn_req):
    """Lane-dense vocab tile: multiple of 128, prefer a divisor of V (no pad)."""
    tn_cap = min(_round_up(tn_req, 128), _round_up(V, 128))
    for tn in range(tn_cap, 0, -128):
        if V % tn == 0:
            return tn
    return tn_cap  # no divisor: pad vocab once in prep


def _pick_tk(H, tk_max):
    """Returns (Hp, tk). Single K block when H <= tk_max, else a clean divisor."""
    if H <= tk_max:
        return H, H
    for tk in range(tk_max - tk_max % 128, 0, -128):
        if H % tk == 0:
            return H, tk
    Hp = _round_up(H, 512)   # pad the hidden dim once; zeros contribute nothing
    return Hp, 512


def prepare_mlm_params(weight, bias, *, tn_req=1024, tk_max=2048, tm_max=512,
                       vmem_budget_bytes=40 * 1024 * 1024):
    """One-time prep (call at parameter init, NOT per forward):
    transpose weight to (H, V) MXU-canonical orientation and pad once."""
    V, H = weight.shape
    assert bias.shape == (V,)

    Hp, tk = _pick_tk(H, tk_max)
    tn = _pick_tn(V, tn_req)

    in_bytes = max(jnp.dtype(weight.dtype).itemsize, 2)
    out_bytes = 4  # budget conservatively for f32 outputs

    def footprint(tm, tn_):
        f = 2 * (tm * tk + tk * tn_) * in_bytes + 2 * tm * tn_ * out_bytes
        if tk != Hp:
            f += tm * tn_ * 4  # accumulator scratch
        return f

    # Keep double-buffered tiles under the budget (fits v7x's 64 MiB VMEM).
    tm_max_eff = tm_max
    while footprint(tm_max_eff, tn) > vmem_budget_bytes and tn > 256:
        tn -= 128
    while footprint(tm_max_eff, tn) > vmem_budget_bytes and tm_max_eff > 128:
        tm_max_eff //= 2

    Vp = _round_up(V, tn)

    w_t = jnp.asarray(weight).T              # (H, V): canonical (K, N) layout
    if Hp != H or Vp != V:
        w_t = jnp.pad(w_t, ((0, Hp - H), (0, Vp - V)))
    b = jnp.asarray(bias)
    if Vp != V:
        b = jnp.pad(b, (0, Vp - V))
    b2 = b.reshape(1, Vp)

    return {
        "w_t": w_t, "b2": b2,
        "V": V, "H": H, "Hp": Hp, "Vp": Vp,
        "tn": tn, "tk": tk, "tm_max": tm_max_eff,
    }


# --------------------------------------------------------------------------
# Forward pass
# --------------------------------------------------------------------------

def masked_language_model_prepared(x, params):
    """Forward of MaskedLanguageModel with pre-prepared (transposed/padded) params."""
    w_t, b2 = params["w_t"], params["b2"]
    V, H, Hp, Vp = params["V"], params["H"], params["Hp"], params["Vp"]
    tn, tk, tm_max = params["tn"], params["tk"], params["tm_max"]

    *lead, Hx = x.shape
    assert Hx == H
    out_dtype = x.dtype

    x2 = x.reshape(-1, H)
    M = x2.shape[0]

    tm = min(tm_max, _round_up(M, 8))
    Mp = _round_up(M, tm)
    if Mp != M or Hp != H:
        x2 = jnp.pad(x2, ((0, Mp - M), (0, Hp - H)))

    vmem_limit = 48 * 1024 * 1024  # > v5e's 16 MiB default, < v7x's 64 MiB physical

    if tk == Hp:
        # Common case: K axis collapsed, activation panel resident across the
        # vocab sweep, single fused matmul + bias + cast, lane-dense store.
        out = pl.pallas_call(
            _mlm_kernel_single_k,
            out_shape=jax.ShapeDtypeStruct((Mp, Vp), out_dtype),
            grid=(Mp // tm, Vp // tn),
            in_specs=[
                pl.BlockSpec((tm, Hp), lambda i, j: (i, 0)),   # activations
                pl.BlockSpec((Hp, tn), lambda i, j: (0, j)),   # weight (K, N)
                pl.BlockSpec((1, tn), lambda i, j: (0, j)),    # bias
            ],
            out_specs=pl.BlockSpec((tm, tn), lambda i, j: (i, j)),
            compiler_params=pltpu.CompilerParams(
                dimension_semantics=("parallel", "parallel"),
                vmem_limit_bytes=vmem_limit),
        )(x2, w_t, b2)
    else:
        # Very large hidden dim: K-tiled reduction (last grid axis, "arbitrary").
        out = pl.pallas_call(
            _mlm_kernel_multi_k,
            out_shape=jax.ShapeDtypeStruct((Mp, Vp), out_dtype),
            grid=(Mp // tm, Vp // tn, Hp // tk),
            in_specs=[
                pl.BlockSpec((tm, tk), lambda i, j, k: (i, k)),
                pl.BlockSpec((tk, tn), lambda i, j, k: (k, j)),
                pl.BlockSpec((1, tn), lambda i, j, k: (0, j)),
            ],
            out_specs=pl.BlockSpec((tm, tn), lambda i, j, k: (i, j)),
            scratch_shapes=[pltpu.VMEM((tm, tn), jnp.float32)],
            compiler_params=pltpu.CompilerParams(
                dimension_semantics=("parallel", "parallel", "arbitrary"),
                vmem_limit_bytes=vmem_limit),
        )(x2, w_t, b2)

    if Mp != M or Vp != V:
        out = out[:M, :V]
    return out.reshape(*lead, V)


def masked_language_model(x, weight, bias, **prep_kwargs):
    """Convenience wrapper taking raw PyTorch-layout (V, H) weight and (V,) bias.
    For repeated calls, hoist prepare_mlm_params() out of the forward pass."""
    return masked_language_model_prepared(x, prepare_mlm_params(weight, bias, **prep_kwargs))


# --------------------------------------------------------------------------
# Self-test
# --------------------------------------------------------------------------

if __name__ == "__main__":
    # Small shapes consistent with the module: batch=2, seq=8, hidden=32, vocab=128.
    B, L, hidden_dim, vocab_size = 2, 8, 32, 128

    key = jax.random.PRNGKey(0)
    kx, kw, kb = jax.random.split(key, 3)

    # nn.Linear default init: U(-1/sqrt(H), 1/sqrt(H)) for weight and bias.
    bound = 1.0 / (hidden_dim ** 0.5)
    weight = jax.random.uniform(kw, (vocab_size, hidden_dim), jnp.float32, -bound, bound)
    bias = jax.random.uniform(kb, (vocab_size,), jnp.float32, -bound, bound)
    x = jax.random.normal(kx, (B, L, hidden_dim), jnp.float32)

    # One-time prep (at "init"), then forward.
    params = prepare_mlm_params(weight, bias)
    out = masked_language_model_prepared(x, params)
    out = jax.block_until_ready(out)

    # Pure-JAX reference of the forward pass (x @ W.T + b).
    expected = jnp.einsum("blh,vh->blv", x, weight) + bias
    assert out.shape == (B, L, vocab_size)
    assert jnp.allclose(out, expected, atol=1e-4, rtol=1e-4), "mismatch vs reference"

    print("KERNEL_OK")
</pallas_src>

<mosaic_0001>
module attributes {stable_mosaic.version = 11 : i64} {
  func.func @_mlm_kernel_single_k(%arg0: i32, %arg1: i32, %arg2: memref<16x32xf32, #tpu.memory_space<vmem>>, %arg3: memref<32x128xf32, #tpu.memory_space<vmem>>, %arg4: memref<1x128xf32, #tpu.memory_space<vmem>>, %arg5: memref<16x128xf32, #tpu.memory_space<vmem>>) attributes {dimension_semantics = [#tpu.dimension_semantics<parallel>, #tpu.dimension_semantics<parallel>], iteration_bounds = array<i64: 1, 1>, scalar_prefetch = 0 : i64, scratch_operands = 0 : i64, tpu.core_type = #tpu.core_type<tc>, window_params = [{transform_indices = @transform_0, window_bounds = array<i64: 16, 32>}, {transform_indices = @transform_1, window_bounds = array<i64: 32, 128>}, {transform_indices = @transform_2, window_bounds = array<i64: 1, 128>}, {transform_indices = @transform_3, window_bounds = array<i64: 16, 128>}]} {
    %c0 = arith.constant 0 : index
    %c0_0 = arith.constant 0 : index
    %0 = vector.load %arg2[%c0, %c0_0] : memref<16x32xf32, #tpu.memory_space<vmem>>, vector<16x32xf32>
    %c0_1 = arith.constant 0 : index
    %c0_2 = arith.constant 0 : index
    %1 = vector.load %arg3[%c0_1, %c0_2] : memref<32x128xf32, #tpu.memory_space<vmem>>, vector<32x128xf32>
    %cst = arith.constant dense<0.000000e+00> : vector<16x128xf32>
    %2 = tpu.matmul %0, %1, %cst {dimension_numbers = #tpu.dot_dimension_numbers<[1], [0], [0], [1], [0, 0, 1, 1], [], []>} : vector<16x32xf32>, vector<32x128xf32>, vector<16x128xf32> -> vector<16x128xf32>
    %c0_3 = arith.constant 0 : index
    %c0_4 = arith.constant 0 : index
    %3 = vector.load %arg4[%c0_3, %c0_4] : memref<1x128xf32, #tpu.memory_space<vmem>>, vector<1x128xf32>
    %4 = vector.broadcast %3 : vector<1x128xf32> to vector<16x128xf32>
    %5 = arith.addf %2, %4 : vector<16x128xf32>
    %c0_5 = arith.constant 0 : index
    %c0_6 = arith.constant 0 : index
    %6 = vector.load %arg5[%c0_5, %c0_6] : memref<16x128xf32, #tpu.memory_space<vmem>>, vector<16x128xf32>
    tpu.vector_store %arg5[%c0_5, %c0_6], %5 {strides = array<i32>} : memref<16x128xf32, #tpu.memory_space<vmem>>, vector<16x128xf32>,
    return
  }
  func.func @transform_0(%arg0: i32, %arg1: i32) -> (i32, i32) {
    %c0_i32 = arith.constant 0 : i32
    %c0_i32_0 = arith.constant 0 : i32
    return %arg0, %c0_i32 : i32, i32
  }
  func.func @transform_1(%arg0: i32, %arg1: i32) -> (i32, i32) {
    %c0_i32 = arith.constant 0 : i32
    %c0_i32_0 = arith.constant 0 : i32
    return %c0_i32, %arg1 : i32, i32
  }
  func.func @transform_2(%arg0: i32, %arg1: i32) -> (i32, i32) {
    %c0_i32 = arith.constant 0 : i32
    %c0_i32_0 = arith.constant 0 : i32
    return %c0_i32, %arg1 : i32, i32
  }
  func.func @transform_3(%arg0: i32, %arg1: i32) -> (i32, i32) {
    %c0_i32 = arith.constant 0 : i32
    return %arg0, %arg1 : i32, i32
  }
}

</mosaic_0001>

<llo_original>
// kernel: tpu_custom_call.1
$region0: #{tpu_custom_call.1}
  #allocation0 [shape = 'u32[]', space=smem, size = 0x4, offset = 0x4, fixed_abs, tag = 'smem constant byte address 0x4 - core index']
  #allocation1 [shape = 'u32[72,128]{1,0:T(1,128)}', space=vmem, size = 0x9000, scoped, tag = 'internal scratch']
  %s0 = inlined_call_operand.hbm [shape: f32[16,32], index: 0, kind: input, shape index: {}]
  %s1 = inlined_call_operand.hbm [shape: f32[32,128], index: 1, kind: input, shape index: {}]
  %s2 = inlined_call_operand.vmem [shape: f32[1,128], index: 2, kind: input, shape index: {}]
  %s3 = inlined_call_operand.hbm [shape: f32[16,128], index: 3, kind: output, shape index: {}]
  %s4 = sld [smem:[#allocation0]]
  $region30: #{tpu_custom_call.1} parent=0
    _
  %s6 = ssub.s32 1, %s4
  %s7 = scalar_select 0, %s6, %s4
  $region1: #{tpu_custom_call.1} parent=0
    #allocation2 [shape = 'u8[8192]{0}', space=vmem, size = 0x2000, scoped, tag = 'input window, operand 0, single buffered']
    #allocation3 [shape = 's32[1]{0}', space=sflag, size = 0x4, scoped, tag = 'scoped memory for tpu_custom_call.1']
    #allocation4 [shape = 's32[1]{0}', space=sflag, size = 0x4, scoped, tag = 'scoped memory for tpu_custom_call.1']
    #allocation5 [shape = 'u8[16384]{0}', space=vmem, size = 0x4000, scoped, tag = 'input window, operand 1, single buffered']
    #allocation6 [shape = 's32[1]{0}', space=sflag, size = 0x4, scoped, tag = 'scoped memory for tpu_custom_call.1']
    #allocation7 [shape = 'u8[8192]{0}', space=vmem, size = 0x2000, scoped, tag = 'output window, operand 0, single buffered']
    %8 = vsyncpa [#allocation3], 0
    %9 = vsyncpa [#allocation6], 0
    %10 = vsyncpa [#allocation4], 0
    // Predicated region
    $region2: #{tpu_custom_call.1} parent=1 // pred_check
      _
    $region3: #{tpu_custom_call.1} parent=1 // pred_check_branch
      %12 = sbr.rel (0) target = $region5
    $region4: #{tpu_custom_call.1} parent=1 // pred_region
      %14 = vsyncadd [#allocation3], 0
      %s15 = sshll.u32 %s0, 4
      %s16 = int_to_ptr.hbm [resolvable:$true] %s15
      %s17 = sshll.u32 [#allocation2], 4
      %s18 = int_to_ptr.vmem [resolvable:$true] %s17
      %23 = dma.hbm_to_vmem [thread:$0]  %s16, 256, %s18, [#allocation3], 128, 128, 8
    $region5: #{tpu_custom_call.1} parent=1 // pred_fallthru
      _
    // Predicated region
    $region6: #{tpu_custom_call.1} parent=1 // pred_check
      _
    $region7: #{tpu_custom_call.1} parent=1 // pred_check_branch
      %25 = sbr.rel (0) target = $region9
    $region8: #{tpu_custom_call.1} parent=1 // pred_region
      %27 = vsyncadd [#allocation6], 0
      %s28 = sshll.u32 %s1, 4
      %s29 = int_to_ptr.hbm [resolvable:$true] %s28
      %s30 = sshll.u32 [#allocation5], 4
      %s31 = int_to_ptr.vmem [resolvable:$true] %s30
      %36 = dma.hbm_to_vmem [thread:$0]  %s29, 512, %s31, [#allocation6], 128, 128, 8
    $region9: #{tpu_custom_call.1} parent=1 // pred_fallthru
      _
    // Predicated region
    $region10: #{tpu_custom_call.1} parent=1 // pred_check
      _
    $region11: #{tpu_custom_call.1} parent=1 // pred_check_branch
      %38 = sbr.rel (0) target = $region13
    $region12: #{tpu_custom_call.1} parent=1 // pred_region
      _
    $region13: #{tpu_custom_call.1} parent=1 // pred_fallthru
      _
    // Predicated region
    $region14: #{tpu_custom_call.1} parent=1 // pred_check
      _
    $region15: #{tpu_custom_call.1} parent=1 // pred_check_branch
      %40 = sbr.rel (0) target = $region17
    $region16: #{tpu_custom_call.1} parent=1 // pred_region
      %42 = dma.done [#allocation3], 256
    $region17: #{tpu_custom_call.1} parent=1 // pred_fallthru
      _
    // Predicated region
    $region18: #{tpu_custom_call.1} parent=1 // pred_check
      _
    $region19: #{tpu_custom_call.1} parent=1 // pred_check_branch
      %44 = sbr.rel (0) target = $region21
    $region20: #{tpu_custom_call.1} parent=1 // pred_region
      %46 = dma.done [#allocation6], 512
    $region21: #{tpu_custom_call.1} parent=1 // pred_fallthru
      _
    %v47 = vld [vmem:[#allocation2] sm:$0xff]
    %v48 = vld [vmem:[#allocation2 + $0x8] sm:$0xff]
    %v49 = vld [vmem:[#allocation5] sm:$0xff]
    %v50 = vld [vmem:[#allocation5 + $0x8] sm:$0xff]
    %v51 = vld [vmem:[#allocation5 + $0x10] sm:$0xff]
    %v52 = vld [vmem:[#allocation5 + $0x18] sm:$0xff]
    %v53 = vld [vmem:[%s2] sm:$0x1]
    %v55 = vperm.slane %v53, 0
    %vm57 = vcmask 261120
    %v59 = vsel %vm57, %v47, 0
    %v62 = vsel %vm57, %v48, 0
    %64 = vmatpush.msra.mxu0 0.0
    %65 = vmatpush.msra.mxu0 0.0
    %66 = vmatpush.msra.mxu0 0.0
    %67 = vmatpush.msra.mxu0 0.0
    %68 = vmatpush.msra.mxu0 0.0
    %69 = vmatpush.msra.mxu0 0.0
    %70 = vmatpush.msra.mxu0 0.0
    %71 = vmatpush.msra.mxu0 0.0
    %72 = vmatpush.msra.mxu0 0.0
    %73 = vmatpush.msra.mxu0 0.0
    %74 = vmatpush.msra.mxu0 0.0
    %75 = vmatpush.msra.mxu0 0.0
    %76 = vmatpush.msra.mxu0 %v52
    %77 = vmatpush.msra.mxu0 %v51
    %78 = vmatpush.msra.mxu0 %v50
    %79 = vmatpush.msra.mxu0 %v49
    %80 = vmatmul.f32.gmra.mxu0 %v59
    %v81 = vpop.f32.mrf.mxu0
    %v82 = vadd.f32 %v55, %v81
    %83 = vmatmul.f32.gmra.mxu0 %v62
    %v84 = vpop.f32.mrf.mxu0
    %v85 = vadd.f32 %v55, %v84
    %86 = vdwg.mxu0
    %87 = vst [vmem:[#allocation7] sm:$0xff] %v82
    %88 = vst [vmem:[#allocation7 + $0x8] sm:$0xff] %v85
    // Predicated region
    $region22: #{tpu_custom_call.1} parent=1 // pred_check
      _
    $region23: #{tpu_custom_call.1} parent=1 // pred_check_branch
      %90 = sbr.rel (0) target = $region25
    $region24: #{tpu_custom_call.1} parent=1 // pred_region
      %92 = vsyncadd [#allocation4], 0
      %s93 = sshll.u32 [#allocation7], 4
      %s94 = int_to_ptr.vmem [resolvable:$true] %s93
      %s95 = sshll.u32 %s3, 4
      %s96 = int_to_ptr.hbm [resolvable:$true] %s95
      %101 = dma.vmem_to_hbm [thread:$0]  %s94, 256, %s96, [#allocation4], 128, 128, 8
    $region25: #{tpu_custom_call.1} parent=1 // pred_fallthru
      _
    // Predicated region
    $region26: #{tpu_custom_call.1} parent=1 // pred_check
      _
    $region27: #{tpu_custom_call.1} parent=1 // pred_check_branch
      %103 = sbr.rel (0) target = $region29
    $region28: #{tpu_custom_call.1} parent=1 // pred_region
      %105 = dma.done [#allocation4], 256
    $region29: #{tpu_custom_call.1} parent=1 // pred_fallthru
      _
    %106 = vsyncpa [#allocation3], 1
    %107 = vsyncpa [#allocation6], 1
    %108 = vsyncpa [#allocation4], 1

</llo_original>
